<compile_context>
chip_gen: v6e
topology: v6e:2x2x1
jax: 0.10.0
libtpu: 0.0.40
codegen_flags: <defaults>
</compile_context>

<pallas_src>
import jax
import jax.numpy as jnp
from jax.experimental import pallas as pl
from jax.experimental.pallas import tpu as pltpu


# Keep the whole spectrogram VMEM-resident only up to ~2M elements
# (~10 MiB at f32 in + u8 out plus temporaries).  Larger inputs use the tiled
# path, which pipelines DMA and can use both TensorCores on v7x.
_SINGLE_BLOCK_MAX_ELEMS = 2 * 1024 * 1024

# Target f32 bytes per row block in the tiled path (~4 MiB sits near the
# measured ~85% of HBM roofline and fits every generation comfortably).
_BLOCK_BYTES_TARGET = 4 * 1024 * 1024

# Ample for the blocks above and safely below physical VMEM on v5e/v6e/v7x.
_VMEM_LIMIT = 32 * 1024 * 1024


def _round_up(n, m):
    return ((n + m - 1) // m) * m


def _specto_image_kernel(x_ref, o_ref):
    """Whole-array path: (H, W) tile resident in VMEM -> (H, W) uint8."""
    x = x_ref[...].astype(jnp.float32)
    high = jnp.max(x, keepdims=True)                      # (1, 1)
    low = jnp.min(x, keepdims=True)                       # (1, 1)
    scale = jnp.maximum(high - low, jnp.float32(1e-5))
    a = jnp.float32(255.0) / scale                        # one tiny exact divide
    # (x - low) >= 0 and a > 0, so y >= 0.5: lower clamp is unnecessary.
    y = (x - low) * a + jnp.float32(0.5)
    # float->uint8 convert truncates toward zero, matching torch .to(torch.uint8)
    o_ref[...] = jnp.minimum(y, jnp.float32(255.0)).astype(jnp.uint8)


def _minmax_partial_kernel(x_ref, min_ref, max_ref):
    """Pass A: per-row-block partial min/max, broadcast into a (1,8,128) tile."""
    x = x_ref[...].astype(jnp.float32)
    min_ref[...] = jnp.full(min_ref.shape, jnp.min(x), dtype=jnp.float32)
    max_ref[...] = jnp.full(max_ref.shape, jnp.max(x), dtype=jnp.float32)


def _normalize_kernel(mins_ref, maxs_ref, x_ref, o_ref):
    """Pass B: reduce the tiny partials in-kernel, then normalize the block."""
    low = jnp.min(mins_ref[...])
    high = jnp.max(maxs_ref[...])
    scale = jnp.maximum(high - low, jnp.float32(1e-5))
    a = jnp.float32(255.0) / scale
    x = x_ref[...].astype(jnp.float32)
    y = (x - low) * a + jnp.float32(0.5)
    o_ref[...] = jnp.minimum(y, jnp.float32(255.0)).astype(jnp.uint8)


def _pick_block_rows(w_padded, h):
    """Row block: multiple of 32, ~_BLOCK_BYTES_TARGET of f32 work, capped at H."""
    rows = (_BLOCK_BYTES_TARGET // 4) // max(w_padded, 1)
    rows = max(32, (rows // 32) * 32)
    return min(rows, _round_up(h, 32))


def specto_image(x, *, force_tiled=False, block_rows=None):
    """x: (1, H, W) spectrogram -> (H, W) uint8 image array."""
    assert x.ndim == 3 and x.shape[0] == 1, "expected (1, H, W) input"
    h, w = x.shape[-2], x.shape[-1]
    x2 = x.reshape(h, w)
    if not jnp.issubdtype(x2.dtype, jnp.floating):
        x2 = x2.astype(jnp.float32)     # ints -> f32; bf16/f16 stay narrow

    if not force_tiled and h * w <= _SINGLE_BLOCK_MAX_ELEMS:
        # Single no-grid block, single-buffered, whole-array VMEM residency.
        return pl.pallas_call(
            _specto_image_kernel,
            out_shape=jax.ShapeDtypeStruct((h, w), jnp.uint8),
            in_specs=[pl.BlockSpec(memory_space=pltpu.MemorySpace.VMEM)],
            out_specs=pl.BlockSpec(memory_space=pltpu.MemorySpace.VMEM),
            compiler_params=pltpu.CompilerParams(vmem_limit_bytes=_VMEM_LIMIT),
        )(x2)

    # ------------------------ Tiled two-pass path ------------------------
    wp = _round_up(w, 128)                              # lane-dense u8 stores
    if block_rows is not None:
        tm = _round_up(int(block_rows), 32)
    else:
        tm = _pick_block_rows(wp, h)
    hp = _round_up(h, tm)
    padded = (hp, wp) != (h, w)

    if padded:
        # Edge padding replicates existing rows/cols: min/max are unchanged
        # and the padded outputs are sliced away below.
        x2 = jnp.pad(x2, ((0, hp - h), (0, wp - w)), mode="edge")

    nb = hp // tm

    # Pass A: independent per-block partial min/max; "parallel" so both v7x
    # TensorCores share the HBM-bound reduction (no resident accumulator).
    mins, maxs = pl.pallas_call(
        _minmax_partial_kernel,
        out_shape=(jax.ShapeDtypeStruct((nb, 8, 128), jnp.float32),
                   jax.ShapeDtypeStruct((nb, 8, 128), jnp.float32)),
        grid=(nb,),
        in_specs=[pl.BlockSpec((tm, wp), lambda i: (i, 0))],
        out_specs=(pl.BlockSpec((1, 8, 128), lambda i: (i, 0, 0)),
                   pl.BlockSpec((1, 8, 128), lambda i: (i, 0, 0))),
        compiler_params=pltpu.CompilerParams(
            dimension_semantics=("parallel",),
            vmem_limit_bytes=_VMEM_LIMIT),
    )(x2)

    # Pass B: partials go straight into the kernel (no XLA scalar epilogue);
    # full-width lane-dense uint8 output blocks; "parallel" grid.
    out_p = pl.pallas_call(
        _normalize_kernel,
        out_shape=jax.ShapeDtypeStruct((hp, wp), jnp.uint8),
        grid=(nb,),
        in_specs=[pl.BlockSpec((nb, 8, 128), lambda i: (0, 0, 0)),
                  pl.BlockSpec((nb, 8, 128), lambda i: (0, 0, 0)),
                  pl.BlockSpec((tm, wp), lambda i: (i, 0))],
        out_specs=pl.BlockSpec((tm, wp), lambda i: (i, 0)),
        compiler_params=pltpu.CompilerParams(
            dimension_semantics=("parallel",),
            vmem_limit_bytes=_VMEM_LIMIT),
    )(mins, maxs, x2)

    if padded:
        out_p = out_p[:h, :w]
    return out_p


def _reference(x):
    """Pure-JAX reference mirroring the torch forward."""
    x = x.astype(jnp.float32)
    high = jnp.max(x, axis=(-2, -1))
    low = jnp.min(x, axis=(-2, -1))
    scale = jnp.maximum(high - low, 1e-5)
    y = (x - low[..., None, None]) / scale[..., None, None]
    y = jnp.clip(y[0] * 255.0 + 0.5, 0.0, 255.0)
    return y.astype(jnp.uint8)


def _check(out, ref):
    assert out.shape == ref.shape, (out.shape, ref.shape)
    assert out.dtype == jnp.uint8
    diff = jnp.max(jnp.abs(out.astype(jnp.int32) - ref.astype(jnp.int32)))
    assert int(diff) <= 1, f"max abs diff {int(diff)} > 1"


if __name__ == "__main__":
    key = jax.random.PRNGKey(0)
    k1, k2, k3 = jax.random.split(key, 3)

    # Case 1: small spectrogram (1, 32, 128) f32 -> single-block path.
    x1 = jax.random.normal(k1, (1, 32, 128), dtype=jnp.float32) * 3.0 - 1.0
    out1 = jax.block_until_ready(specto_image(x1))
    _check(out1, _reference(x1))

    # Case 2: force the tiled two-pass path (lane-aligned W, H multiple of tm).
    x2 = jax.random.normal(k2, (1, 64, 256), dtype=jnp.float32) * 5.0 + 2.0
    out2 = jax.block_until_ready(specto_image(x2, force_tiled=True, block_rows=32))
    _check(out2, _reference(x2))

    # Case 3: awkward shape + bf16 input -> edge padding (H 50->64, W 200->256),
    # native narrow-dtype reads, output sliced back to (50, 200).
    x3 = (jax.random.normal(k3, (1, 50, 200), dtype=jnp.float32) * 2.0 + 0.5
          ).astype(jnp.bfloat16)
    out3 = jax.block_until_ready(specto_image(x3, force_tiled=True, block_rows=32))
    _check(out3, _reference(x3))

    print("KERNEL_OK")
</pallas_src>

<mosaic_0001>
module attributes {stable_mosaic.version = 11 : i64} {
  func.func @_specto_image_kernel(%arg0: memref<32x128xf32, #tpu.memory_space<vmem>>, %arg1: memref<32x128xi8, #tpu.memory_space<vmem>>) attributes {dimension_semantics = [], scalar_prefetch = 0 : i64, scratch_operands = 0 : i64, tpu.core_type = #tpu.core_type<tc>} {
    %c0 = arith.constant 0 : index
    %c0_0 = arith.constant 0 : index
    %0 = vector.load %arg0[%c0, %c0_0] : memref<32x128xf32, #tpu.memory_space<vmem>>, vector<32x128xf32>
    %1 = vector.shape_cast %0 : vector<32x128xf32> to vector<1x32x128xf32>
    %cst = arith.constant dense<0xFF800000> : vector<1xf32>
    %2 = vector.multi_reduction <maximumf>, %1, %cst [1, 2] : vector<1x32x128xf32> to vector<1xf32>
    %3 = vector.shape_cast %2 : vector<1xf32> to vector<1x1x1xf32>
    %4 = vector.extract %3[0, 0, 0] : f32 from vector<1x1x1xf32>
    %5 = vector.broadcast %4 : f32 to vector<1x1xf32>
    %6 = vector.shape_cast %0 : vector<32x128xf32> to vector<1x32x128xf32>
    %cst_1 = arith.constant dense<0x7F800000> : vector<1xf32>
    %7 = vector.multi_reduction <minimumf>, %6, %cst_1 [1, 2] : vector<1x32x128xf32> to vector<1xf32>
    %8 = vector.shape_cast %7 : vector<1xf32> to vector<1x1x1xf32>
    %9 = vector.extract %8[0, 0, 0] : f32 from vector<1x1x1xf32>
    %10 = vector.broadcast %9 : f32 to vector<1x1xf32>
    %11 = arith.subf %5, %10 : vector<1x1xf32>
    %cst_2 = arith.constant 9.99999974E-6 : f32
    %12 = vector.broadcast %cst_2 : f32 to vector<1x1xf32>
    %13 = arith.maximumf %11, %12 : vector<1x1xf32>
    %cst_3 = arith.constant 2.550000e+02 : f32
    %14 = vector.broadcast %cst_3 : f32 to vector<1x1xf32>
    %15 = arith.divf %14, %13 : vector<1x1xf32>
    %16 = vector.broadcast %10 : vector<1x1xf32> to vector<32x128xf32>
    %17 = arith.subf %0, %16 : vector<32x128xf32>
    %18 = vector.broadcast %15 : vector<1x1xf32> to vector<32x128xf32>
    %19 = arith.mulf %17, %18 : vector<32x128xf32>
    %cst_4 = arith.constant 5.000000e-01 : f32
    %20 = vector.broadcast %cst_4 : f32 to vector<32x128xf32>
    %21 = arith.addf %19, %20 : vector<32x128xf32>
    %cst_5 = arith.constant 2.550000e+02 : f32
    %22 = vector.broadcast %cst_5 : f32 to vector<32x128xf32>
    %23 = arith.minimumf %21, %22 : vector<32x128xf32>
    %24 = arith.fptoui %23 : vector<32x128xf32> to vector<32x128xi8>
    %c0_6 = arith.constant 0 : index
    %c0_7 = arith.constant 0 : index
    %25 = vector.load %arg1[%c0_6, %c0_7] : memref<32x128xi8, #tpu.memory_space<vmem>>, vector<32x128xi8>
    tpu.vector_store %arg1[%c0_6, %c0_7], %24 {strides = array<i32>} : memref<32x128xi8, #tpu.memory_space<vmem>>, vector<32x128xi8>,
    return
  }
}

</mosaic_0001>

<llo_original>
// kernel: tpu_custom_call.1
$region0: #{tpu_custom_call.1}
  #allocation0 [shape = 'u32[]', space=smem, size = 0x4, offset = 0x4, fixed_abs, tag = 'smem constant byte address 0x4 - core index']
  #allocation1 [shape = 'u32[144,128]{1,0:T(1,128)}', space=vmem, size = 0x12000, scoped, tag = 'internal scratch']
  %s0 = inlined_call_operand.hbm [shape: f32[32,128], index: 0, kind: input, shape index: {}]
  %s1 = inlined_call_operand.hbm [shape: u8[32,128], index: 1, kind: output, shape index: {}]
  %s2 = sld [smem:[#allocation0]]
  $region18: #{tpu_custom_call.1} parent=0
    _
  %s4 = ssub.s32 1, %s2
  %s5 = scalar_select 0, %s4, %s2
  $region1: #{tpu_custom_call.1} parent=0
    #allocation2 [shape = 'u8[16384]{0}', space=vmem, size = 0x4000, scoped, tag = 'input window, operand 0, single buffered']
    #allocation3 [shape = 's32[1]{0}', space=sflag, size = 0x4, scoped, tag = 'scoped memory for tpu_custom_call.1']
    #allocation4 [shape = 's32[1]{0}', space=sflag, size = 0x4, scoped, tag = 'scoped memory for tpu_custom_call.1']
    #allocation5 [shape = 'u8[4096]{0}', space=vmem, size = 0x1000, scoped, tag = 'output window, operand 0, single buffered']
    %6 = vsyncpa [#allocation3], 0
    %7 = vsyncpa [#allocation4], 0
    // Predicated region
    $region2: #{tpu_custom_call.1} parent=1 // pred_check
      _
    $region3: #{tpu_custom_call.1} parent=1 // pred_check_branch
      %9 = sbr.rel (0) target = $region5
    $region4: #{tpu_custom_call.1} parent=1 // pred_region
      %s11 = ssub.s32 512, 512
      %12 = vsyncadd [#allocation3], %s11
      %s13 = sshll.u32 [#allocation2], 4
      %s14 = int_to_ptr.vmem [resolvable:$true] %s13
      %19 = dma.hbm_to_vmem [thread:$0]  %s0, 512, %s14, [#allocation3], 128, 128, 8
    $region5: #{tpu_custom_call.1} parent=1 // pred_fallthru
      _
    // Predicated region
    $region6: #{tpu_custom_call.1} parent=1 // pred_check
      _
    $region7: #{tpu_custom_call.1} parent=1 // pred_check_branch
      %21 = sbr.rel (0) target = $region9
    $region8: #{tpu_custom_call.1} parent=1 // pred_region
      %22 = dma.done [#allocation3], 512
    $region9: #{tpu_custom_call.1} parent=1 // pred_fallthru
      _
    %v23 = vld [vmem:[#allocation2] sm:$0xff]
    %v24 = vld [vmem:[#allocation2 + $0x8] sm:$0xff]
    %v25 = vld [vmem:[#allocation2 + $0x10] sm:$0xff]
    %v26 = vld [vmem:[#allocation2 + $0x18] sm:$0xff]
    %v27 = vmax.f32 %v23, %v24
    %v28 = vmax.f32 %v25, %v26
    %v29 = vmax.f32 %v27, %v28
    %30 = vmax.xlane.f32.xlu0 %v29
    %v31 = vpop.xlane.xlu0 %30
    %v32 = vrot.slane %v31, 4
    %v33 = vmax.f32 %v31, %v32
    %v34 = vrot.slane %v33, 2
    %v35 = vmax.f32 %v33, %v34
    %v36 = vrot.slane %v35, 1
    %v37 = vmax.f32 %v35, %v36
    %s38 = vtos %v37
    %v39 = vstv %s38
    %v40 = vmin.f32 %v23, %v24
    %v41 = vmin.f32 %v25, %v26
    %v42 = vmin.f32 %v40, %v41
    %43 = vmin.xlane.f32.xlu0 %v42
    %v44 = vpop.xlane.xlu0 %43
    %v45 = vrot.slane %v44, 4
    %v46 = vmin.f32 %v44, %v45
    %v47 = vrot.slane %v46, 2
    %v48 = vmin.f32 %v46, %v47
    %v49 = vrot.slane %v48, 1
    %v50 = vmin.f32 %v48, %v49
    %s51 = vtos %v50
    %v52 = vstv %s51
    %v53 = vsub.f32 %v39, %v52
    %v54 = vmax.f32 %v53, 1e-05
    %v55 = vrcp.pop %v54
    %v56 = vmul.f32 255.0, %v55
    %v57 = vsub.f32 %v23, %v52
    %v58 = vsub.f32 %v24, %v52
    %v59 = vsub.f32 %v25, %v52
    %v60 = vsub.f32 %v26, %v52
    %v61 = vmul.f32 %v57, %v56
    %v62 = vmul.f32 %v58, %v56
    %v63 = vmul.f32 %v59, %v56
    %v64 = vmul.f32 %v60, %v56
    %v65 = vadd.f32 %v61, 0.5
    %v66 = vadd.f32 %v62, 0.5
    %v67 = vadd.f32 %v63, 0.5
    %v68 = vadd.f32 %v64, 0.5
    %v69 = vmin.f32 %v65, 255.0
    %v70 = vmin.f32 %v66, 255.0
    %v71 = vmin.f32 %v67, 255.0
    %v72 = vmin.f32 %v68, 255.0
    %v73 = vmax.f32 %v69, 0.0
    %v74 = vmax.f32 %v70, 0.0
    %v75 = vmax.f32 %v71, 0.0
    %v76 = vmax.f32 %v72, 0.0
    %v77 = vmin.f32 %v73, 255.0
    %v78 = vmin.f32 %v74, 255.0
    %v79 = vmin.f32 %v75, 255.0
    %v80 = vmin.f32 %v76, 255.0
    %v81 = vcvt.f32.s32.to.zero.pseudo %v77
    %v82 = vcvt.f32.s32.to.zero.pseudo %v78
    %v83 = vcvt.f32.s32.to.zero.pseudo %v79
    %v84 = vcvt.f32.s32.to.zero.pseudo %v80
    %v85 = vpack.c.b16 %v82, %v81
    %v86 = vpack.c.b16 %v84, %v83
    %v87 = vpack.c.b8 %v86, %v85
    %88 = vst [vmem:[#allocation5] sm:$0xff] %v87
    // Predicated region
    $region10: #{tpu_custom_call.1} parent=1 // pred_check
      _
    $region11: #{tpu_custom_call.1} parent=1 // pred_check_branch
      %90 = sbr.rel (0) target = $region13
    $region12: #{tpu_custom_call.1} parent=1 // pred_region
      %s92 = ssub.s32 128, 128
      %93 = vsyncadd [#allocation4], %s92
      %s95 = sshll.u32 [#allocation5], 4
      %s96 = int_to_ptr.vmem [resolvable:$true] %s95
      %98 = dma.vmem_to_hbm [thread:$0]  %s96, 128, %s1, [#allocation4]
    $region13: #{tpu_custom_call.1} parent=1 // pred_fallthru
      _
    // Predicated region
    $region14: #{tpu_custom_call.1} parent=1 // pred_check
      _
    $region15: #{tpu_custom_call.1} parent=1 // pred_check_branch
      %100 = sbr.rel (0) target = $region17
    $region16: #{tpu_custom_call.1} parent=1 // pred_region
      %101 = dma.done [#allocation4], 128
    $region17: #{tpu_custom_call.1} parent=1 // pred_fallthru
      _
    %102 = vsyncpa [#allocation3], 1
    %103 = vsyncpa [#allocation4], 1

</llo_original>
